<compile_context>
chip_gen: v7x
topology: tpu7x:2x2x1
jax: 0.10.0
libtpu: 0.0.40
codegen_flags: <defaults>
</compile_context>

<pallas_src>
import math
from typing import NamedTuple

import numpy as np
import jax
import jax.numpy as jnp
from jax import lax
from jax.experimental import pallas as pl
from jax.experimental.pallas import tpu as pltpu


# ----------------------------- config ---------------------------------------
NUM_CHANNELS = 32          # backbone.num_channels
NUM_POS_FEATS = 16         # -> pos has 2*NUM_POS_FEATS = 32 channels
TEMPERATURE = 10000.0
NORMALIZE = True
SCALE = 2.0 * math.pi
EPS = 1e-6

_VMEM_LIMIT = 32 * 1024 * 1024   # safe on v5e/v6e (128 MiB) and v7x (64 MiB)
_MAX_TILE = 4096                 # lane-tile upper bound (multiple of 128)

# Trace-time constants for the sine embedding (hoisted out of the kernel body,
# passed as tiny (NPF, 1) inputs).  cos(a) == sin(a + pi/2).
_I = np.arange(NUM_POS_FEATS)
_INV_DIM_T_NP = (
    TEMPERATURE ** (-(2.0 * (_I // 2)) / NUM_POS_FEATS)
).astype(np.float32).reshape(NUM_POS_FEATS, 1)
_PHASE_NP = np.where(_I % 2 == 0, 0.0, np.pi / 2.0).astype(np.float32).reshape(
    NUM_POS_FEATS, 1)


class NestedTensor(NamedTuple):
    tensors: jax.Array
    mask: jax.Array


def _round_up(v, m):
    return ((v + m - 1) // m) * m


# -------------------- fused Pallas kernel: conv + sine pos -------------------
def fused_backbone_kernel(w_ref, inv_ref, ph_ref, a_ref, y_ref, x_ref,
                          feat_ref, pos_ref):
    # w_ref : (Cout, Kpad) bf16  -- conv weights, bias folded into column K
    # a_ref : (Kpad, TM)   bf16  -- im2col panel, row K is the constant 1.0 row
    # inv_ref/ph_ref: (NPF, 1) f32 -- precomputed 1/dim_t and sin/cos phase
    # y_ref/x_ref  : (1, TM)   f32 -- normalized & scaled cumsum embeddings
    # feat_ref: (Cout, TM) f32,  pos_ref: (2*NPF, TM) f32  (lane-dense stores)

    # Conv as matmul on the MXU (bias comes for free through the 1.0 row),
    # fused ReLU.  f32 accumulation via preferred_element_type.
    acc = jnp.dot(w_ref[...], a_ref[...], preferred_element_type=jnp.float32)
    feat_ref[...] = jnp.maximum(acc, 0.0).astype(feat_ref.dtype)

    # Sine position embedding: one transcendental per element (EUP slot),
    # constants are loaded, not recomputed, per tile.
    inv = inv_ref[...]                                   # (NPF, 1)
    ph = ph_ref[...]                                     # (NPF, 1)
    pos_ref[:NUM_POS_FEATS, :] = jnp.sin(y_ref[...] * inv + ph)   # pos_y
    pos_ref[NUM_POS_FEATS:, :] = jnp.sin(x_ref[...] * inv + ph)   # pos_x


# ------------------------------ forward pass ---------------------------------
def backbone_forward(tensors, mask, conv_w, conv_b):
    """Mirror of Backbone.forward(NestedTensor(tensors, mask)).

    tensors: (B, 3, H, W) f32, mask: (B, H, W) bool (True = padding).
    Returns (NestedTensor(feat NCHW, mask_ds), pos NCHW)."""
    stride, pad = 2, 1
    B, Cin, H, W = tensors.shape
    Cout, _, kh, kw = conv_w.shape
    Ho = (H + 2 * pad - kh) // stride + 1
    Wo = (W + 2 * pad - kw) // stride + 1
    M = Ho * Wo
    N = B * M                                   # batch folded into lane axis
    K = Cin * kh * kw                           # 27
    Kpad = _round_up(K + 1, 32)                 # +1 bias row -> 28 -> 32

    # ---- mask downsample: F.interpolate(mode='nearest') to conv output size --
    row_idx = (np.arange(Ho) * H) // Ho
    col_idx = (np.arange(Wo) * W) // Wo
    mask_ds = mask[:, row_idx][:, :, col_idx]            # bool (B, Ho, Wo)

    # ---- sine-embedding glue: cumsum (scan) + global normalization ----------
    # stays in XLA so the kernel can tile the spatial axis freely.
    nm = (~mask_ds).astype(jnp.float32)
    y_embed = jnp.cumsum(nm, axis=1)
    x_embed = jnp.cumsum(nm, axis=2)
    if NORMALIZE:
        y_embed = y_embed / (y_embed[:, -1:, :] + EPS) * SCALE
        x_embed = x_embed / (x_embed[:, :, -1:] + EPS) * SCALE

    # ---- lane tiling: pad B*M up to a multiple of a 128-multiple tile -------
    TM = min(_MAX_TILE, _round_up(N, 128))
    Npad = _round_up(N, TM)
    grid = (Npad // TM,)

    # ---- im2col glue, bf16, laid out (Kpad, B*M) -----------------------------
    # K-axis ordering (ci, kh, kw) matches conv_w.reshape(Cout, Cin*kh*kw).
    # TODO(synk): replace with an in-kernel halo-DMA patch build.
    xb = tensors.astype(jnp.bfloat16).transpose(1, 0, 2, 3)      # (Cin,B,H,W)
    xp = jnp.pad(xb, ((0, 0), (0, 0), (pad, pad), (pad, pad)))
    cols = [xp[:, :, ih:ih + stride * Ho:stride, iw:iw + stride * Wo:stride]
            for ih in range(kh) for iw in range(kw)]             # (Cin,B,Ho,Wo)
    A = jnp.stack(cols, axis=1).reshape(K, N)                    # (27, B*M)
    A = jnp.concatenate(
        [A,
         jnp.ones((1, N), jnp.bfloat16),                         # bias row (k=27)
         jnp.zeros((Kpad - K - 1, N), jnp.bfloat16)], axis=0)    # (Kpad, B*M)
    if Npad > N:
        A = jnp.pad(A, ((0, 0), (0, Npad - N)))

    # Weights with bias folded into column K.
    Wmat = jnp.concatenate(
        [conv_w.reshape(Cout, K),
         conv_b.reshape(Cout, 1),
         jnp.zeros((Cout, Kpad - K - 1), conv_w.dtype)],
        axis=1).astype(jnp.bfloat16)                              # (Cout, Kpad)

    y2 = y_embed.reshape(1, N)
    x2 = x_embed.reshape(1, N)
    if Npad > N:
        y2 = jnp.pad(y2, ((0, 0), (0, Npad - N)))
        x2 = jnp.pad(x2, ((0, 0), (0, Npad - N)))

    C = 2 * NUM_POS_FEATS

    feat_slab, pos_slab = pl.pallas_call(
        fused_backbone_kernel,
        out_shape=(jax.ShapeDtypeStruct((Cout, Npad), tensors.dtype),
                   jax.ShapeDtypeStruct((C, Npad), jnp.float32)),
        grid=grid,
        in_specs=[
            pl.BlockSpec((Cout, Kpad), lambda m: (0, 0)),            # weights
            pl.BlockSpec((NUM_POS_FEATS, 1), lambda m: (0, 0)),      # inv_dim_t
            pl.BlockSpec((NUM_POS_FEATS, 1), lambda m: (0, 0)),      # phase
            pl.BlockSpec((Kpad, TM), lambda m: (0, m)),              # patches
            pl.BlockSpec((1, TM), lambda m: (0, m)),                 # y_embed
            pl.BlockSpec((1, TM), lambda m: (0, m)),                 # x_embed
        ],
        out_specs=(
            pl.BlockSpec((Cout, TM), lambda m: (0, m)),              # feat
            pl.BlockSpec((C, TM), lambda m: (0, m)),                 # pos
        ),
        compiler_params=pltpu.CompilerParams(
            dimension_semantics=("parallel",),
            vmem_limit_bytes=_VMEM_LIMIT,
        ),
    )(Wmat, jnp.asarray(_INV_DIM_T_NP), jnp.asarray(_PHASE_NP), A, y2, x2)

    # (Cout, B*M) -> NCHW  (tiny leading-axis transpose; lane-dense kernel
    # stores were prioritized over avoiding this reshape per perf review).
    feat = jnp.transpose(
        feat_slab[:, :N].reshape(Cout, B, Ho, Wo), (1, 0, 2, 3))
    pos = jnp.transpose(
        pos_slab[:, :N].reshape(C, B, Ho, Wo), (1, 0, 2, 3)).astype(feat.dtype)

    return NestedTensor(feat, mask_ds), pos


backbone_forward_jit = jax.jit(backbone_forward)


# ------------------------------ reference ------------------------------------
def _ref_forward(tensors, mask, conv_w, conv_b):
    feat = lax.conv_general_dilated(
        tensors, conv_w, window_strides=(2, 2), padding=((1, 1), (1, 1)),
        dimension_numbers=("NCHW", "OIHW", "NCHW"),
        precision=lax.Precision.HIGHEST,
    ) + conv_b[None, :, None, None]
    feat = jnp.maximum(feat, 0.0)

    B, _, Hm, Wm = tensors.shape
    Ho, Wo = feat.shape[-2:]
    ri = (np.arange(Ho) * Hm) // Ho
    ci = (np.arange(Wo) * Wm) // Wo
    mask_ds = np.asarray(mask)[:, ri][:, :, ci]

    nm = (~mask_ds).astype(np.float32)
    y_e = np.cumsum(nm, axis=1)
    x_e = np.cumsum(nm, axis=2)
    y_e = y_e / (y_e[:, -1:, :] + EPS) * SCALE
    x_e = x_e / (x_e[:, :, -1:] + EPS) * SCALE
    dim_t = TEMPERATURE ** (2 * (np.arange(NUM_POS_FEATS) // 2) / NUM_POS_FEATS)
    px = x_e[..., None] / dim_t
    py = y_e[..., None] / dim_t
    px = np.stack((np.sin(px[..., 0::2]), np.cos(px[..., 1::2])), axis=4).reshape(
        *px.shape[:3], -1)
    py = np.stack((np.sin(py[..., 0::2]), np.cos(py[..., 1::2])), axis=4).reshape(
        *py.shape[:3], -1)
    pos = np.concatenate((py, px), axis=3).transpose(0, 3, 1, 2)
    return feat, mask_ds, pos.astype(np.float32)


# ------------------------------- main ----------------------------------------
if __name__ == "__main__":
    key = jax.random.PRNGKey(0)
    k_img, k_w, k_b = jax.random.split(key, 3)

    B, Cin, H, W = 2, 3, 16, 16
    tensors = jax.random.normal(k_img, (B, Cin, H, W), dtype=jnp.float32)

    # True = padded pixel (DETR convention); sample 1 has padding bottom/right.
    hh = jnp.arange(H)[None, :, None]
    ww = jnp.arange(W)[None, None, :]
    valid_h = jnp.array([16, 12])[:, None, None]
    valid_w = jnp.array([16, 10])[:, None, None]
    mask = (hh >= valid_h) | (ww >= valid_w)                    # (B, H, W) bool

    conv_w = 0.1 * jax.random.normal(k_w, (NUM_CHANNELS, Cin, 3, 3), jnp.float32)
    conv_b = 0.01 * jax.random.normal(k_b, (NUM_CHANNELS,), jnp.float32)

    (x_nt, pos) = backbone_forward_jit(tensors, mask, conv_w, conv_b)
    jax.block_until_ready(x_nt.tensors)
    jax.block_until_ready(x_nt.mask)
    jax.block_until_ready(pos)

    # correctness vs. pure-JAX/numpy reference
    # NOTE: conv runs the native bf16 MXU path (per perf review); the looser
    # tolerance documents bf16 input/weight rounding.  pos stays f32 (1e-4).
    ref_feat, ref_mask, ref_pos = _ref_forward(tensors, mask, conv_w, conv_b)
    np.testing.assert_allclose(np.asarray(x_nt.tensors), np.asarray(ref_feat),
                               rtol=2e-2, atol=2e-2)
    np.testing.assert_array_equal(np.asarray(x_nt.mask), ref_mask)
    np.testing.assert_allclose(np.asarray(pos), ref_pos, rtol=1e-4, atol=1e-4)

    print("KERNEL_OK")
</pallas_src>

<mosaic_0001>
module attributes {stable_mosaic.version = 11 : i64} {
  func.func @fused_backbone_kernel(%arg0: i32, %arg1: memref<32x32xbf16, #tpu.memory_space<vmem>>, %arg2: memref<16x1xf32, #tpu.memory_space<vmem>>, %arg3: memref<16x1xf32, #tpu.memory_space<vmem>>, %arg4: memref<32x128xbf16, #tpu.memory_space<vmem>>, %arg5: memref<1x128xf32, #tpu.memory_space<vmem>>, %arg6: memref<1x128xf32, #tpu.memory_space<vmem>>, %arg7: memref<32x128xf32, #tpu.memory_space<vmem>>, %arg8: memref<32x128xf32, #tpu.memory_space<vmem>>) attributes {dimension_semantics = [#tpu.dimension_semantics<parallel>], iteration_bounds = array<i64: 1>, scalar_prefetch = 0 : i64, scratch_operands = 0 : i64, tpu.core_type = #tpu.core_type<tc>, window_params = [{pipeline_mode = #tpu.pipeline_mode<synchronous>, transform_indices = @transform_0, window_bounds = array<i64: 32, 32>}, {pipeline_mode = #tpu.pipeline_mode<synchronous>, transform_indices = @transform_1, window_bounds = array<i64: 16, 1>}, {pipeline_mode = #tpu.pipeline_mode<synchronous>, transform_indices = @transform_2, window_bounds = array<i64: 16, 1>}, {transform_indices = @transform_3, window_bounds = array<i64: 32, 128>}, {transform_indices = @transform_4, window_bounds = array<i64: 1, 128>}, {transform_indices = @transform_5, window_bounds = array<i64: 1, 128>}, {transform_indices = @transform_6, window_bounds = array<i64: 32, 128>}, {transform_indices = @transform_7, window_bounds = array<i64: 32, 128>}]} {
    %c0 = arith.constant 0 : index
    %c0_0 = arith.constant 0 : index
    %0 = vector.load %arg1[%c0, %c0_0] : memref<32x32xbf16, #tpu.memory_space<vmem>>, vector<32x32xbf16>
    %c0_1 = arith.constant 0 : index
    %c0_2 = arith.constant 0 : index
    %1 = vector.load %arg4[%c0_1, %c0_2] : memref<32x128xbf16, #tpu.memory_space<vmem>>, vector<32x128xbf16>
    %cst = arith.constant dense<0.000000e+00> : vector<32x128xf32>
    %2 = tpu.matmul %0, %1, %cst {dimension_numbers = #tpu.dot_dimension_numbers<[1], [0], [0], [1], [0, 0, 1, 1], [], []>} : vector<32x32xbf16>, vector<32x128xbf16>, vector<32x128xf32> -> vector<32x128xf32>
    %cst_3 = arith.constant 0.000000e+00 : f32
    %3 = vector.broadcast %cst_3 : f32 to vector<32x128xf32>
    %4 = arith.maximumf %2, %3 : vector<32x128xf32>
    %c0_4 = arith.constant 0 : index
    %c0_5 = arith.constant 0 : index
    %5 = vector.load %arg7[%c0_4, %c0_5] : memref<32x128xf32, #tpu.memory_space<vmem>>, vector<32x128xf32>
    tpu.vector_store %arg7[%c0_4, %c0_5], %4 {strides = array<i32>} : memref<32x128xf32, #tpu.memory_space<vmem>>, vector<32x128xf32>,
    %c0_6 = arith.constant 0 : index
    %c0_7 = arith.constant 0 : index
    %6 = vector.load %arg2[%c0_6, %c0_7] : memref<16x1xf32, #tpu.memory_space<vmem>>, vector<16x1xf32>
    %c0_8 = arith.constant 0 : index
    %c0_9 = arith.constant 0 : index
    %7 = vector.load %arg3[%c0_8, %c0_9] : memref<16x1xf32, #tpu.memory_space<vmem>>, vector<16x1xf32>
    %c0_10 = arith.constant 0 : index
    %c0_11 = arith.constant 0 : index
    %8 = vector.load %arg5[%c0_10, %c0_11] : memref<1x128xf32, #tpu.memory_space<vmem>>, vector<1x128xf32>
    %9 = vector.broadcast %8 : vector<1x128xf32> to vector<16x128xf32>
    %10 = vector.broadcast %6 : vector<16x1xf32> to vector<16x128xf32>
    %11 = arith.mulf %9, %10 : vector<16x128xf32>
    %12 = vector.broadcast %7 : vector<16x1xf32> to vector<16x128xf32>
    %13 = arith.addf %11, %12 : vector<16x128xf32>
    %14 = math.sin %13 : vector<16x128xf32>
    %c0_12 = arith.constant 0 : index
    %c0_13 = arith.constant 0 : index
    %15 = vector.load %arg8[%c0_12, %c0_13] : memref<32x128xf32, #tpu.memory_space<vmem>>, vector<16x128xf32>
    tpu.vector_store %arg8[%c0_12, %c0_13], %14 {strides = array<i32>} : memref<32x128xf32, #tpu.memory_space<vmem>>, vector<16x128xf32>,
    %c0_14 = arith.constant 0 : index
    %c0_15 = arith.constant 0 : index
    %16 = vector.load %arg6[%c0_14, %c0_15] : memref<1x128xf32, #tpu.memory_space<vmem>>, vector<1x128xf32>
    %17 = vector.broadcast %16 : vector<1x128xf32> to vector<16x128xf32>
    %18 = vector.broadcast %6 : vector<16x1xf32> to vector<16x128xf32>
    %19 = arith.mulf %17, %18 : vector<16x128xf32>
    %20 = vector.broadcast %7 : vector<16x1xf32> to vector<16x128xf32>
    %21 = arith.addf %19, %20 : vector<16x128xf32>
    %22 = math.sin %21 : vector<16x128xf32>
    %c16 = arith.constant 16 : index
    %c0_16 = arith.constant 0 : index
    %23 = vector.load %arg8[%c16, %c0_16] : memref<32x128xf32, #tpu.memory_space<vmem>>, vector<16x128xf32>
    tpu.vector_store %arg8[%c16, %c0_16], %22 {strides = array<i32>} : memref<32x128xf32, #tpu.memory_space<vmem>>, vector<16x128xf32>,
    return
  }
  func.func @transform_0(%arg0: i32) -> (i32, i32) {
    %c0_i32 = arith.constant 0 : i32
    %c0_i32_0 = arith.constant 0 : i32
    %c0_i32_1 = arith.constant 0 : i32
    return %c0_i32, %c0_i32_0 : i32, i32
  }
  func.func @transform_1(%arg0: i32) -> (i32, i32) {
    %c0_i32 = arith.constant 0 : i32
    %c0_i32_0 = arith.constant 0 : i32
    %c0_i32_1 = arith.constant 0 : i32
    return %c0_i32, %c0_i32_0 : i32, i32
  }
  func.func @transform_2(%arg0: i32) -> (i32, i32) {
    %c0_i32 = arith.constant 0 : i32
    %c0_i32_0 = arith.constant 0 : i32
    %c0_i32_1 = arith.constant 0 : i32
    return %c0_i32, %c0_i32_0 : i32, i32
  }
  func.func @transform_3(%arg0: i32) -> (i32, i32) {
    %c0_i32 = arith.constant 0 : i32
    %c0_i32_0 = arith.constant 0 : i32
    return %c0_i32, %arg0 : i32, i32
  }
  func.func @transform_4(%arg0: i32) -> (i32, i32) {
    %c0_i32 = arith.constant 0 : i32
    %c0_i32_0 = arith.constant 0 : i32
    return %c0_i32, %arg0 : i32, i32
  }
  func.func @transform_5(%arg0: i32) -> (i32, i32) {
    %c0_i32 = arith.constant 0 : i32
    %c0_i32_0 = arith.constant 0 : i32
    return %c0_i32, %arg0 : i32, i32
  }
  func.func @transform_6(%arg0: i32) -> (i32, i32) {
    %c0_i32 = arith.constant 0 : i32
    %c0_i32_0 = arith.constant 0 : i32
    return %c0_i32, %arg0 : i32, i32
  }
  func.func @transform_7(%arg0: i32) -> (i32, i32) {
    %c0_i32 = arith.constant 0 : i32
    %c0_i32_0 = arith.constant 0 : i32
    return %c0_i32, %arg0 : i32, i32
  }
}

</mosaic_0001>

<llo_original>
// kernel: backbone_forward.1
$region0: #{backbone_forward.1}
  #allocation0 [shape = 'u32[]', space=smem, size = 0x4, offset = 0x4, fixed_abs, tag = 'smem constant byte address 0x4 - core index']
  #allocation1 [shape = 'u32[144,128]{1,0:T(1,128)}', space=vmem, size = 0x12000, scoped, tag = 'internal scratch']
  %s0 = inlined_call_operand.vmem [shape: bf16[32,32], index: 0, kind: input, shape index: {}]
  %s1 = inlined_call_operand.vmem [shape: f32[16,1], index: 1, kind: input, shape index: {}]
  %s2 = inlined_call_operand.vmem [shape: f32[16,1], index: 2, kind: input, shape index: {}]
  %s3 = inlined_call_operand.vmem [shape: bf16[32,128], index: 3, kind: input, shape index: {}]
  %s4 = inlined_call_operand.vmem [shape: f32[1,128], index: 4, kind: input, shape index: {}]
  %s5 = inlined_call_operand.vmem [shape: f32[1,128], index: 5, kind: input, shape index: {}]
  %s6 = inlined_call_operand.vmem [shape: f32[32,128], index: 6, kind: output, shape index: {0}]
  %s7 = inlined_call_operand.vmem [shape: f32[32,128], index: 7, kind: output, shape index: {1}]
  %8 = xla_tuple %s6, %s7
  %s9 = sld [smem:[#allocation0]]
  $region42: #{backbone_forward.1} parent=0
    _
  %s11 = ssub.s32 1, %s9
  %s12 = scalar_select 0, %s11, %s9
  // Predicated region
  $region2: #{backbone_forward.1} parent=0 // pred_check
    _
  $region3: #{backbone_forward.1} parent=0 // pred_check_branch
    %14 = sbr.rel (0) target = $region5
  $region4: #{backbone_forward.1} parent=0 // pred_region
    _
  $region5: #{backbone_forward.1} parent=0 // pred_fallthru
    _
  // Predicated region
  $region6: #{backbone_forward.1} parent=0 // pred_check
    _
  $region7: #{backbone_forward.1} parent=0 // pred_check_branch
    %16 = sbr.rel (0) target = $region9
  $region8: #{backbone_forward.1} parent=0 // pred_region
    _
  $region9: #{backbone_forward.1} parent=0 // pred_fallthru
    _
  // Predicated region
  $region10: #{backbone_forward.1} parent=0 // pred_check
    _
  $region11: #{backbone_forward.1} parent=0 // pred_check_branch
    %18 = sbr.rel (0) target = $region13
  $region12: #{backbone_forward.1} parent=0 // pred_region
    _
  $region13: #{backbone_forward.1} parent=0 // pred_fallthru
    _
  // Predicated region
  $region14: #{backbone_forward.1} parent=0 // pred_check
    _
  $region15: #{backbone_forward.1} parent=0 // pred_check_branch
    %20 = sbr.rel (0) target = $region17
  $region16: #{backbone_forward.1} parent=0 // pred_region
    _
  $region17: #{backbone_forward.1} parent=0 // pred_fallthru
    _
  // Predicated region
  $region18: #{backbone_forward.1} parent=0 // pred_check
    _
  $region19: #{backbone_forward.1} parent=0 // pred_check_branch
    %22 = sbr.rel (0) target = $region21
  $region20: #{backbone_forward.1} parent=0 // pred_region
    _
  $region21: #{backbone_forward.1} parent=0 // pred_fallthru
    _
  // Predicated region
  $region22: #{backbone_forward.1} parent=0 // pred_check
    _
  $region23: #{backbone_forward.1} parent=0 // pred_check_branch
    %24 = sbr.rel (0) target = $region25
  $region24: #{backbone_forward.1} parent=0 // pred_region
    _
  $region25: #{backbone_forward.1} parent=0 // pred_fallthru
    _
  %v26 = vld [vmem:[%s0] sm:$0xf]
  %v27 = vld [vmem:[%s0 + $0x4] sm:$0xf]
  %v28 = vld [vmem:[%s0 + $0x8] sm:$0xf]
  %v29 = vld [vmem:[%s0 + $0xc] sm:$0xf]
  %v30 = vld [vmem:[%s3] sm:$0xf]
  %v31 = vld [vmem:[%s3 + $0x4] sm:$0xf]
  %v32 = vld [vmem:[%s3 + $0x8] sm:$0xf]
  %v33 = vld [vmem:[%s3 + $0xc] sm:$0xf]
  %v38 = vunpack.c.l.b16 %v26
  %v39 = vunpack.c.l.b16 %v27
  %v40 = vunpack.c.l.b16 %v28
  %v41 = vunpack.c.l.b16 %v29
  %v42 = vpack.c.b16 %v39, %v38
  %v43 = vpack.c.b16 %v41, %v40
  %v48 = vunpack.c.l.b16 %v30
  %v49 = vunpack.c.l.b16 %v31
  %v50 = vunpack.c.l.b16 %v32
  %v51 = vunpack.c.l.b16 %v33
  %v52 = vpack.c.b16 %v49, %v48
  %v53 = vpack.c.b16 %v51, %v50
  %vm56 = vcmask 261120
  %v58 = vsel %vm56, %v42, 0
  %v61 = vsel %vm56, %v43, 0
  %63 = vmatprep.subr.bf16.mxu0 0
  %64 = vmatpush1.bf16.msra.mxu0 %v52
  %65 = vmatprep.subr.bf16.mxu0 0
  %66 = vmatpush1.bf16.msra.mxu0 %v53
  %67 = vmatprep.subr.bf16.mxu0 0
  %68 = vmatpush1.bf16.msra.mxu0 0
  %69 = vmatprep.subr.bf16.mxu0 0
  %70 = vmatpush1.bf16.msra.mxu0 0
  %71 = vmatprep.subr.bf16.mxu0 0
  %72 = vmatpush1.bf16.msra.mxu0 0
  %73 = vmatprep.subr.bf16.mxu0 0
  %74 = vmatpush1.bf16.msra.mxu0 0
  %75 = vmatprep.subr.bf16.mxu0 0
  %76 = vmatpush1.bf16.msra.mxu0 0
  %77 = vmatprep.subr.bf16.mxu0 0
  %78 = vmatpush1.bf16.msra.mxu0 0
  %79 = vmatprep.subr.bf16.mxu0 0
  %80 = vmatpush1.bf16.msra.mxu0 0
  %81 = vmatprep.subr.bf16.mxu0 0
  %82 = vmatpush1.bf16.msra.mxu0 0
  %83 = vmatprep.subr.bf16.mxu0 0
  %84 = vmatpush1.bf16.msra.mxu0 0
  %85 = vmatprep.subr.bf16.mxu0 0
  %86 = vmatpush1.bf16.msra.mxu0 0
  %87 = vmatprep.subr.bf16.mxu0 0
  %88 = vmatpush1.bf16.msra.mxu0 0
  %89 = vmatprep.subr.bf16.mxu0 0
  %90 = vmatpush1.bf16.msra.mxu0 0
  %91 = vmatprep.subr.bf16.mxu0 0
  %92 = vmatpush1.bf16.msra.mxu0 0
  %93 = vmatprep.subr.bf16.mxu0 0
  %94 = vmatpush1.bf16.msra.mxu0 0
  %95 = vmatprep.mubr.bf16.mxu0 0
  %96 = vmatmul.mubr.bf16.gmra.mrb[0].mxu0 %v58
  %v97 = vpop.f32.mrb[0].mxu0
  %v98 = vadd.f32 0.0, %v97
  %v99 = vpop.f32.mrb[0].mxu0
  %v100 = vpop.f32.mrb[0].mxu0
  %v101 = vadd.f32 0.0, %v100
  %v102 = vpop.f32.mrb[0].mxu0
  %103 = vmatprep.mubr.bf16.mxu0 0
  %104 = vmatmul.mubr.bf16.gmra.mrb[0].mxu0 %v61
  %v105 = vpop.f32.mrb[0].mxu0
  %v106 = vadd.f32 0.0, %v105
  %v107 = vpop.f32.mrb[0].mxu0
  %v108 = vpop.f32.mrb[0].mxu0
  %v109 = vadd.f32 0.0, %v108
  %v110 = vpop.f32.mrb[0].mxu0
  %111 = vdwg.mxu0
  %v112 = vmax.f32 %v98, 0.0
  %v113 = vmax.f32 %v101, 0.0
  %v114 = vmax.f32 %v106, 0.0
  %v115 = vmax.f32 %v109, 0.0
  %116 = vst [vmem:[%s6] sm:$0xff] %v112
  %117 = vst [vmem:[%s6 + $0x8] sm:$0xff] %v113
  %118 = vst [vmem:[%s6 + $0x10] sm:$0xff] %v114
  %119 = vst [vmem:[%s6 + $0x18] sm:$0xff] %v115
  %v120 = vld [vmem:[%s1] sm:$0xff]
  %v121 = vld [vmem:[%s1 + $0x8] sm:$0xff]
  %v122 = vld [vmem:[%s2] sm:$0xff]
  %v123 = vld [vmem:[%s2 + $0x8] sm:$0xff]
  %v124 = vld [vmem:[%s4] sm:$0x1]
  %v126 = vlaneseq
  %v127 = vshrl.u32 %v126, 7
  %v128 = vsub.s32 0, %v127
  %v129 = vrot.slane %v124, %v128
  %132 = vset.pattern.permute.xlu0 0
  %133 = vperm.xlu0 %132, %v120
  %v134 = vpop.permute.xlu0 %133
  %137 = vset.pattern.permute.xlu0 0
  %138 = vperm.xlu0 %137, %v121
  %v139 = vpop.permute.xlu0 %138
  %v141 = vmul.f32 %v129, %v134
  %v142 = vmul.f32 %v129, %v139
  %144 = vset.pattern.permute.xlu0 0
  %145 = vperm.xlu0 %144, %v122
  %v146 = vpop.permute.xlu0 %145
  %149 = vset.pattern.permute.xlu0 0
  %150 = vperm.xlu0 %149, %v123
  %v151 = vpop.permute.xlu0 %150
  %v153 = vadd.f32 %v141, %v146
  %v154 = vadd.f32 %v142, %v151
  %v155 = vand.u32 2147483647, %v153
  %vm156 = vcmp.le.f32.partialorder %v155, 0.7853982
  %vm157 = vcmp.lt.s32.totalorder %v153, 0
  %v158 = vand.u32 %v153, 2139095040
  %v159 = vshrl.u32 %v158, 23
  %v160 = vsub.s32 %v159, 127
  %v161 = vand.u32 2147483647, %v153
  %v162 = vand.u32 %v161, 8388607
  %v163 = vor.u32 %v162, 8388608
  %v164 = vsub.s32 0, %v163
  %v165 = vadd.s32 %v160, 1
  %vm166 = vcmp.gt.s32.totalorder %v165, 0
  %v167 = vsel %vm166, %v165, 0
  %v168 = vshrl.u32 %v167, 5
  %v169 = vand.u32 %v167, 31
  %v170 = vsub.s32 32, %v169
  %v171 = vshrl.u32 683565275, %v170
  %v172 = vshll.u32 683565275, %v169
  %v173 = vshrl.u32 2475754826, %v170
  %v174 = vor.u32 %v172, %v173
  %v175 = vshll.u32 2475754826, %v169
  %v176 = vshrl.u32 2131351028, %v170
  %v177 = vor.u32 %v175, %v176
  %v178 = vshll.u32 2131351028, %v169
  %v179 = vshrl.u32 2102212464, %v170
  %v180 = vor.u32 %v178, %v179
  %v181 = vshll.u32 2102212464, %v169
  %v182 = vshrl.u32 920167782, %v170
  %v183 = vor.u32 %v181, %v182
  %v184 = vshll.u32 920167782, %v169
  %v185 = vshrl.u32 1326507024, %v170
  %v186 = vor.u32 %v184, %v185
  %vm187 = vcmp.lt.s32.totalorder %v168, 1
  %vm188 = vcmp.lt.s32.totalorder %v168, 2
  %vm189 = vcmp.lt.s32.totalorder %v168, 3
  %vm190 = vcmp.lt.s32.totalorder %v168, 4
  %v191 = vsel %vm187, %v171, %v174
  %v192 = vsel %vm190, %v180, 2102212464
  %v193 = vsel %vm189, %v177, %v192
  %v194 = vsel %vm188, %v191, %v193
  %v195 = vsel %vm187, %v174, %v177
  %v196 = vsel %vm190, %v183, 920167782
  %v197 = vsel %vm189, %v180, %v196
  %v198 = vsel %vm188, %v195, %v197
  %v199 = vsel %vm187, %v177, %v180
  %v200 = vsel %vm190, %v186, 1326507024
  %v201 = vsel %vm189, %v183, %v200
  %v202 = vsel %vm188, %v199, %v201
  %v203 = vshll.u32 %v163, 8
  %v204 = vmul.u32.u64.compose %v203, %v202
  %v205 = vextract.low.u32 %v204
  %v206 = vextract.high.u32 %v204
  %v207 = vmul.u32.u64.compose %v203, %v198
  %v208 = vextract.low.u32 %v207
  %v209 = vextract.high.u32 %v207
  %v210 = vmul.u32 %v203, %v194
  %v211 = vadd.s32 %v206, %v208
  %vm212 = vc.u32 %v206, %v208
  %v213 = vadd.s32 %v209, 1
  %v214 = vsel %vm212, %v213, %v209
  %v215 = vadd.s32 %v210, %v214
  %v216 = vadd.s32 %v215, 536870912
  %v217 = vshrl.u32 %v216, 30
  %v218 = vshll.u32 %v217, 30
  %v219 = vsub.s32 %v215, %v218
  %vm220 = vcmp.lt.s32.totalorder %v219, 0
  %v221 = vsub.s32 0, %v219
  %v222 = vsel %vm220, %v221, %v219
  %v223 = vclz %v222
  %v224 = vsub.s32 %v223, 2
  %vm225 = vcmp.gt.s32.totalorder 0, %v224
  %v226 = vsel %vm225, 0, %v224
  %v227 = vsub.s32 32, %v226
  %v228 = vshll.u32 %v219, %v226
  %v229 = vshrl.u32 %v211, %v227
  %v230 = vor.u32 %v228, %v229
  %v231 = vsub.s32 4294967266, %v226
  %v232 = vadd.s32 %v231, 127
  %v233 = vshll.u32 %v232, 23
  %v234 = vor.u32 4788187, %v233
  %v235 = vand.u32 2147483647, %v234
  %v237 = vcvt.s32.f32 %v230
  %v238 = vmul.f32 %v237, %v235
  %v239 = vxor.u32 %v238, 2147483648
  %v240 = vsel %vm157, %v239, %v238
  %v241 = vsub.s32 4, %v217
  %v242 = vsel %vm157, %v241, %v217
  %v243 = vsel %vm156, %v153, %v240
  %v244 = vsel %vm156, 0, %v242
  %v245 = vcosq.f32.pop %v243
  %v246 = vsinq.f32.pop %v243
  %vm247 = vweird.f32 %v153
  %v248 = vadd.s32 %v244, 3
  %v249 = vand.u32 %v248, 3
  %vm250 = vcmp.lt.s32.totalorder %v249, 2
  %vm251 = vcmp.eq.s32.totalorder %v249, 0
  %v252 = vxor.u32 %v246, 2147483648
  %v253 = vsel %vm251, %v245, %v252
  %vm254 = vcmp.eq.s32.totalorder %v249, 2
  %v255 = vxor.u32 %v245, 2147483648
  %v256 = vsel %vm254, %v255, %v246
  %v257 = vsel %vm250, %v253, %v256
  %v258 = vsel %vm247, nan, %v257
  %v259 = vand.u32 2147483647, %v154
  %vm260 = vcmp.le.f32.partialorder %v259, 0.7853982
  %vm261 = vcmp.lt.s32.totalorder %v154, 0
  %v262 = vand.u32 %v154, 2139095040
  %v263 = vshrl.u32 %v262, 23
  %v264 = vsub.s32 %v263, 127
  %v265 = vand.u32 2147483647, %v154
  %v266 = vand.u32 %v265, 8388607
  %v267 = vor.u32 %v266, 8388608
  %v268 = vsub.s32 0, %v267
  %v269 = vadd.s32 %v264, 1
  %vm270 = vcmp.gt.s32.totalorder %v269, 0
  %v271 = vsel %vm270, %v269, 0
  %v272 = vshrl.u32 %v271, 5
  %v273 = vand.u32 %v271, 31
  %v274 = vsub.s32 32, %v273
  %v275 = vshrl.u32 683565275, %v274
  %v276 = vshll.u32 683565275, %v273
  %v277 = vshrl.u32 2475754826, %v274
  %v278 = vor.u32 %v276, %v277
  %v279 = vshll.u32 2475754826, %v273
  %v280 = vshrl.u32 2131351028, %v274
  %v281 = vor.u32 %v279, %v280
  %v282 = vshll.u32 2131351028, %v273
  %v283 = vshrl.u32 2102212464, %v274
  %v284 = vor.u32 %v282, %v283
  %v285 = vshll.u32 2102212464, %v273
  %v286 = vshrl.u32 920167782, %v274
  %v287 = vor.u32 %v285, %v286
  %v288 = vshll.u32 920167782, %v273
  %v289 = vshrl.u32 1326507024, %v274
  %v290 = vor.u32 %v288, %v289
  %vm291 = vcmp.lt.s32.totalorder %v272, 1
  %vm292 = vcmp.lt.s32.totalorder %v272, 2
  %vm293 = vcmp.lt.s32.totalorder %v272, 3
  %vm294 = vcmp.lt.s32.totalorder %v272, 4
  %v295 = vsel %vm291, %v275, %v278
  %v296 = vsel %vm294, %v284, 2102212464
  %v297 = vsel %vm293, %v281, %v296
  %v298 = vsel %vm292, %v295, %v297
  %v299 = vsel %vm291, %v278, %v281
  %v300 = vsel %vm294, %v287, 920167782
  %v301 = vsel %vm293, %v284, %v300
  %v302 = vsel %vm292, %v299, %v301
  %v303 = vsel %vm291, %v281, %v284
  %v304 = vsel %vm294, %v290, 1326507024
  %v305 = vsel %vm293, %v287, %v304
  %v306 = vsel %vm292, %v303, %v305
  %v307 = vshll.u32 %v267, 8
  %v308 = vmul.u32.u64.compose %v307, %v306
  %v309 = vextract.low.u32 %v308
  %v310 = vextract.high.u32 %v308
  %v311 = vmul.u32.u64.compose %v307, %v302
  %v312 = vextract.low.u32 %v311
  %v313 = vextract.high.u32 %v311
  %v314 = vmul.u32 %v307, %v298
  %v315 = vadd.s32 %v310, %v312
  %vm316 = vc.u32 %v310, %v312
  %v317 = vadd.s32 %v313, 1
  %v318 = vsel %vm316, %v317, %v313
  %v319 = vadd.s32 %v314, %v318
  %v320 = vadd.s32 %v319, 536870912
  %v321 = vshrl.u32 %v320, 30
  %v322 = vshll.u32 %v321, 30
  %v323 = vsub.s32 %v319, %v322
  %vm324 = vcmp.lt.s32.totalorder %v323, 0
  %v325 = vsub.s32 0, %v323
  %v326 = vsel %vm324, %v325, %v323
  %v327 = vclz %v326
  %v328 = vsub.s32 %v327, 2
  %vm329 = vcmp.gt.s32.totalorder 0, %v328
  %v330 = vsel %vm329, 0, %v328
  %v331 = vsub.s32 32, %v330
  %v332 = vshll.u32 %v323, %v330
  %v333 = vshrl.u32 %v315, %v331
  %v334 = vor.u32 %v332, %v333
  %v335 = vsub.s32 4294967266, %v330
  %v336 = vadd.s32 %v335, 127
  %v337 = vshll.u32 %v336, 23
  %v338 = vor.u32 4788187, %v337
  %v339 = vand.u32 2147483647, %v338
  %v341 = vcvt.s32.f32 %v334
  %v342 = vmul.f32 %v341, %v339
  %v343 = vxor.u32 %v342, 2147483648
  %v344 = vsel %vm261, %v343, %v342
  %v345 = vsub.s32 4, %v321
  %v346 = vsel %vm261, %v345, %v321
  %v347 = vsel %vm260, %v154, %v344
  %v348 = vsel %vm260, 0, %v346
  %v349 = vcosq.f32.pop %v347
  %v350 = vsinq.f32.pop %v347
  %vm351 = vweird.f32 %v154
  %v352 = vadd.s32 %v348, 3
  %v353 = vand.u32 %v352, 3
  %vm354 = vcmp.lt.s32.totalorder %v353, 2
  %vm355 = vcmp.eq.s32.totalorder %v353, 0
  %v356 = vxor.u32 %v350, 2147483648
  %v357 = vsel %vm355, %v349, %v356
  %vm358 = vcmp.eq.s32.totalorder %v353, 2
  %v359 = vxor.u32 %v349, 2147483648
  %v360 = vsel %vm358, %v359, %v350
  %v361 = vsel %vm354, %v357, %v360
  %v362 = vsel %vm351, nan, %v361
  %363 = vst [vmem:[%s7] sm:$0xff] %v258
  %364 = vst [vmem:[%s7 + $0x8] sm:$0xff] %v362
  %v365 = vld [vmem:[%s5] sm:$0x1]
  %v367 = vlaneseq
  %v368 = vshrl.u32 %v367, 7
  %v369 = vsub.s32 0, %v368
  %v370 = vrot.slane %v365, %v369
  %v372 = vmul.f32 %v370, %v134
  %v373 = vmul.f32 %v370, %v139
  %v374 = vadd.f32 %v372, %v146
  %v375 = vadd.f32 %v373, %v151
  %v376 = vand.u32 2147483647, %v374
  %vm377 = vcmp.le.f32.partialorder %v376, 0.7853982
  %vm378 = vcmp.lt.s32.totalorder %v374, 0
  %v379 = vand.u32 %v374, 2139095040
  %v380 = vshrl.u32 %v379, 23
  %v381 = vsub.s32 %v380, 127
  %v382 = vand.u32 2147483647, %v374
  %v383 = vand.u32 %v382, 8388607
  %v384 = vor.u32 %v383, 8388608
  %v385 = vsub.s32 0, %v384
  %v386 = vadd.s32 %v381, 1
  %vm387 = vcmp.gt.s32.totalorder %v386, 0
  %v388 = vsel %vm387, %v386, 0
  %v389 = vshrl.u32 %v388, 5
  %v390 = vand.u32 %v388, 31
  %v391 = vsub.s32 32, %v390
  %v392 = vshrl.u32 683565275, %v391
  %v393 = vshll.u32 683565275, %v390
  %v394 = vshrl.u32 2475754826, %v391
  %v395 = vor.u32 %v393, %v394
  %v396 = vshll.u32 2475754826, %v390
  %v397 = vshrl.u32 2131351028, %v391
  %v398 = vor.u32 %v396, %v397
  %v399 = vshll.u32 2131351028, %v390
  %v400 = vshrl.u32 2102212464, %v391
  %v401 = vor.u32 %v399, %v400
  %v402 = vshll.u32 2102212464, %v390
  %v403 = vshrl.u32 920167782, %v391
  %v404 = vor.u32 %v402, %v403
  %v405 = vshll.u32 920167782, %v390
  %v406 = vshrl.u32 1326507024, %v391
  %v407 = vor.u32 %v405, %v406
  %vm408 = vcmp.lt.s32.totalorder %v389, 1
  %vm409 = vcmp.lt.s32.totalorder %v389, 2
  %vm410 = vcmp.lt.s32.totalorder %v389, 3
  %vm411 = vcmp.lt.s32.totalorder %v389, 4
  %v412 = vsel %vm408, %v392, %v395
  %v413 = vsel %vm411, %v401, 2102212464
  %v414 = vsel %vm410, %v398, %v413
  %v415 = vsel %vm409, %v412, %v414
  %v416 = vsel %vm408, %v395, %v398
  %v417 = vsel %vm411, %v404, 920167782
  %v418 = vsel %vm410, %v401, %v417
  %v419 = vsel %vm409, %v416, %v418
  %v420 = vsel %vm408, %v398, %v401
  %v421 = vsel %vm411, %v407, 1326507024
  %v422 = vsel %vm410, %v404, %v421
  %v423 = vsel %vm409, %v420, %v422
  %v424 = vshll.u32 %v384, 8
  %v425 = vmul.u32.u64.compose %v424, %v423
  %v426 = vextract.low.u32 %v425
  %v427 = vextract.high.u32 %v425
  %v428 = vmul.u32.u64.compose %v424, %v419
  %v429 = vextract.low.u32 %v428
  %v430 = vextract.high.u32 %v428
  %v431 = vmul.u32 %v424, %v415
  %v432 = vadd.s32 %v427, %v429
  %vm433 = vc.u32 %v427, %v429
  %v434 = vadd.s32 %v430, 1
  %v435 = vsel %vm433, %v434, %v430
  %v436 = vadd.s32 %v431, %v435
  %v437 = vadd.s32 %v436, 536870912
  %v438 = vshrl.u32 %v437, 30
  %v439 = vshll.u32 %v438, 30
  %v440 = vsub.s32 %v436, %v439
  %vm441 = vcmp.lt.s32.totalorder %v440, 0
  %v442 = vsub.s32 0, %v440
  %v443 = vsel %vm441, %v442, %v440
  %v444 = vclz %v443
  %v445 = vsub.s32 %v444, 2
  %vm446 = vcmp.gt.s32.totalorder 0, %v445
  %v447 = vsel %vm446, 0, %v445
  %v448 = vsub.s32 32, %v447
  %v449 = vshll.u32 %v440, %v447
  %v450 = vshrl.u32 %v432, %v448
  %v451 = vor.u32 %v449, %v450
  %v452 = vsub.s32 4294967266, %v447
  %v453 = vadd.s32 %v452, 127
  %v454 = vshll.u32 %v453, 23
  %v455 = vor.u32 4788187, %v454
  %v456 = vand.u32 2147483647, %v455
  %v458 = vcvt.s32.f32 %v451
  %v459 = vmul.f32 %v458, %v456
  %v460 = vxor.u32 %v459, 2147483648
  %v461 = vsel %vm378, %v460, %v459
  %v462 = vsub.s32 4, %v438
  %v463 = vsel %vm378, %v462, %v438
  %v464 = vsel %vm377, %v374, %v461
  %v465 = vsel %vm377, 0, %v463
  %v466 = vcosq.f32.pop %v464
  %v467 = vsinq.f32.pop %v464
  %vm468 = vweird.f32 %v374
  %v469 = vadd.s32 %v465, 3
  %v470 = vand.u32 %v469, 3
  %vm471 = vcmp.lt.s32.totalorder %v470, 2
  %vm472 = vcmp.eq.s32.totalorder %v470, 0
  %v473 = vxor.u32 %v467, 2147483648
  %v474 = vsel %vm472, %v466, %v473
  %vm475 = vcmp.eq.s32.totalorder %v470, 2
  %v476 = vxor.u32 %v466, 2147483648
  %v477 = vsel %vm475, %v476, %v467
  %v478 = vsel %vm471, %v474, %v477
  %v479 = vsel %vm468, nan, %v478
  %v480 = vand.u32 2147483647, %v375
  %vm481 = vcmp.le.f32.partialorder %v480, 0.7853982
  %vm482 = vcmp.lt.s32.totalorder %v375, 0
  %v483 = vand.u32 %v375, 2139095040
  %v484 = vshrl.u32 %v483, 23
  %v485 = vsub.s32 %v484, 127
  %v486 = vand.u32 2147483647, %v375
  %v487 = vand.u32 %v486, 8388607
  %v488 = vor.u32 %v487, 8388608
  %v489 = vsub.s32 0, %v488
  %v490 = vadd.s32 %v485, 1
  %vm491 = vcmp.gt.s32.totalorder %v490, 0
  %v492 = vsel %vm491, %v490, 0
  %v493 = vshrl.u32 %v492, 5
  %v494 = vand.u32 %v492, 31
  %v495 = vsub.s32 32, %v494
  %v496 = vshrl.u32 683565275, %v495
  %v497 = vshll.u32 683565275, %v494
  %v498 = vshrl.u32 2475754826, %v495
  %v499 = vor.u32 %v497, %v498
  %v500 = vshll.u32 2475754826, %v494
  %v501 = vshrl.u32 2131351028, %v495
  %v502 = vor.u32 %v500, %v501
  %v503 = vshll.u32 2131351028, %v494
  %v504 = vshrl.u32 2102212464, %v495
  %v505 = vor.u32 %v503, %v504
  %v506 = vshll.u32 2102212464, %v494
  %v507 = vshrl.u32 920167782, %v495
  %v508 = vor.u32 %v506, %v507
  %v509 = vshll.u32 920167782, %v494
  %v510 = vshrl.u32 1326507024, %v495
  %v511 = vor.u32 %v509, %v510
  %vm512 = vcmp.lt.s32.totalorder %v493, 1
  %vm513 = vcmp.lt.s32.totalorder %v493, 2
  %vm514 = vcmp.lt.s32.totalorder %v493, 3
  %vm515 = vcmp.lt.s32.totalorder %v493, 4
  %v516 = vsel %vm512, %v496, %v499
  %v517 = vsel %vm515, %v505, 2102212464
  %v518 = vsel %vm514, %v502, %v517
  %v519 = vsel %vm513, %v516, %v518
  %v520 = vsel %vm512, %v499, %v502
  %v521 = vsel %vm515, %v508, 920167782
  %v522 = vsel %vm514, %v505, %v521
  %v523 = vsel %vm513, %v520, %v522
  %v524 = vsel %vm512, %v502, %v505
  %v525 = vsel %vm515, %v511, 1326507024
  %v526 = vsel %vm514, %v508, %v525
  %v527 = vsel %vm513, %v524, %v526
  %v528 = vshll.u32 %v488, 8
  %v529 = vmul.u32.u64.compose %v528, %v527
  %v530 = vextract.low.u32 %v529
  %v531 = vextract.high.u32 %v529
  %v532 = vmul.u32.u64.compose %v528, %v523
  %v533 = vextract.low.u32 %v532
  %v534 = vextract.high.u32 %v532
  %v535 = vmul.u32 %v528, %v519
  %v536 = vadd.s32 %v531, %v533
  %vm537 = vc.u32 %v531, %v533
  %v538 = vadd.s32 %v534, 1
  %v539 = vsel %vm537, %v538, %v534
  %v540 = vadd.s32 %v535, %v539
  %v541 = vadd.s32 %v540, 536870912
  %v542 = vshrl.u32 %v541, 30
  %v543 = vshll.u32 %v542, 30
  %v544 = vsub.s32 %v540, %v543
  %vm545 = vcmp.lt.s32.totalorder %v544, 0
  %v546 = vsub.s32 0, %v544
  %v547 = vsel %vm545, %v546, %v544
  %v548 = vclz %v547
  %v549 = vsub.s32 %v548, 2
  %vm550 = vcmp.gt.s32.totalorder 0, %v549
  %v551 = vsel %vm550, 0, %v549
  %v552 = vsub.s32 32, %v551
  %v553 = vshll.u32 %v544, %v551
  %v554 = vshrl.u32 %v536, %v552
  %v555 = vor.u32 %v553, %v554
  %v556 = vsub.s32 4294967266, %v551
  %v557 = vadd.s32 %v556, 127
  %v558 = vshll.u32 %v557, 23
  %v559 = vor.u32 4788187, %v558
  %v560 = vand.u32 2147483647, %v559
  %v562 = vcvt.s32.f32 %v555
  %v563 = vmul.f32 %v562, %v560
  %v564 = vxor.u32 %v563, 2147483648
  %v565 = vsel %vm482, %v564, %v563
  %v566 = vsub.s32 4, %v542
  %v567 = vsel %vm482, %v566, %v542
  %v568 = vsel %vm481, %v375, %v565
  %v569 = vsel %vm481, 0, %v567
  %v570 = vcosq.f32.pop %v568
  %v571 = vsinq.f32.pop %v568
  %vm572 = vweird.f32 %v375
  %v573 = vadd.s32 %v569, 3
  %v574 = vand.u32 %v573, 3
  %vm575 = vcmp.lt.s32.totalorder %v574, 2
  %vm576 = vcmp.eq.s32.totalorder %v574, 0
  %v577 = vxor.u32 %v571, 2147483648
  %v578 = vsel %vm576, %v570, %v577
  %vm579 = vcmp.eq.s32.totalorder %v574, 2
  %v580 = vxor.u32 %v570, 2147483648
  %v581 = vsel %vm579, %v580, %v571
  %v582 = vsel %vm575, %v578, %v581
  %v583 = vsel %vm572, nan, %v582
  %584 = vst [vmem:[%s7 + $0x10] sm:$0xff] %v479
  %585 = vst [vmem:[%s7 + $0x18] sm:$0xff] %v583
  // Predicated region
  $region26: #{backbone_forward.1} parent=0 // pred_check
    _
  $region27: #{backbone_forward.1} parent=0 // pred_check_branch
    %587 = sbr.rel (0) target = $region29
  $region28: #{backbone_forward.1} parent=0 // pred_region
    _
  $region29: #{backbone_forward.1} parent=0 // pred_fallthru
    _
  // Predicated region
  $region30: #{backbone_forward.1} parent=0 // pred_check
    _
  $region31: #{backbone_forward.1} parent=0 // pred_check_branch
    %589 = sbr.rel (0) target = $region33
  $region32: #{backbone_forward.1} parent=0 // pred_region
    _
  $region33: #{backbone_forward.1} parent=0 // pred_fallthru
    _
  // Predicated region
  $region34: #{backbone_forward.1} parent=0 // pred_check
    _
  $region35: #{backbone_forward.1} parent=0 // pred_check_branch
    %591 = sbr.rel (0) target = $region37
  $region36: #{backbone_forward.1} parent=0 // pred_region
    _
  $region37: #{backbone_forward.1} parent=0 // pred_fallthru
    _
  // Predicated region
  $region38: #{backbone_forward.1} parent=0 // pred_check
    _
  $region39: #{backbone_forward.1} parent=0 // pred_check_branch
    %593 = sbr.rel (0) target = $region41
  $region40: #{backbone_forward.1} parent=0 // pred_region
    _
  $region41: #{backbone_forward.1} parent=0 // pred_fallthru
    _

</llo_original>
